<compile_context>
chip_gen: v5e
topology: v5e:2x2
jax: 0.10.0
libtpu: 0.0.40
codegen_flags: <defaults>
</compile_context>

<pallas_src>
import numpy as np

import jax
import jax.numpy as jnp
from jax.experimental import pallas as pl
from jax.experimental.pallas import tpu as pltpu


# ---------------- fused Pallas kernel (the whole forward pass) ----------------

def policy_fused_kernel(x_ref, m1_ref, b1_ref, m2_ref, b2_ref, m3_ref, b3_ref,
                        wo_ref, bo_ref, out_ref):
    # x: (1, 64); m1: (64, 256); m2: (256, 512); m3: (512, 256); wo: (256, 64)
    # biases are (1, N) rows.  Everything stays in VMEM / vregs.
    h = x_ref[...]
    h = jnp.maximum(
        jnp.dot(h, m1_ref[...], preferred_element_type=jnp.float32) + b1_ref[...], 0.0)
    h = jnp.maximum(
        jnp.dot(h, m2_ref[...], preferred_element_type=jnp.float32) + b2_ref[...], 0.0)
    h = jnp.maximum(
        jnp.dot(h, m3_ref[...], preferred_element_type=jnp.float32) + b3_ref[...], 0.0)
    logits = jnp.dot(h, wo_ref[...], preferred_element_type=jnp.float32) + bo_ref[...]

    # numerically-safe softmax; divide goes to the EUP via approx reciprocal
    m = jnp.max(logits, axis=-1, keepdims=True)
    e = jnp.exp(logits - m)
    s = jnp.sum(e, axis=-1, keepdims=True)
    out_ref[...] = e * pl.reciprocal(s, approx=True)


def _vmem():
    # whole-array, untiled, resident in VMEM (total working set ~1.2 MiB)
    return pl.BlockSpec(memory_space=pltpu.MemorySpace.VMEM)


def policy_forward(packed, x_nchw):
    """Runs the fused Pallas kernel.  `packed` comes from init_params()."""
    # matches `torch.tensor(x).type('torch.FloatTensor')`; (1,1,H,W) -> (1, H*W)
    x = x_nchw.astype(jnp.float32).reshape(1, -1)
    n_out = packed["bo"].shape[-1]
    out = pl.pallas_call(
        policy_fused_kernel,
        out_shape=jax.ShapeDtypeStruct((1, n_out), jnp.float32),
        in_specs=[_vmem()] * 9,
        out_specs=_vmem(),
    )(x, packed["m1"], packed["b1"], packed["m2"], packed["b2"],
      packed["m3"], packed["b3"], packed["wo"], packed["bo"])
    return out.reshape(-1)  # (input_size**2,)


# ---------------- one-time weight packing (hoisted out of the hot path) -------

def _conv_as_dense(w_oihw, H, W, ph, pw):
    """Fold a stride-1 zero-padded conv into a dense matrix M such that
    out_flat_chw = in_flat_chw @ M   (exact; PyTorch cross-correlation)."""
    w = np.asarray(w_oihw, dtype=np.float32)
    Cout, Cin, KH, KW = w.shape
    M = np.zeros((Cin * H * W, Cout * H * W), dtype=np.float32)
    ci = np.arange(Cin)
    co = np.arange(Cout)
    for kh in range(KH):
        dh = kh - ph
        for kw in range(KW):
            dw = kw - pw
            wk = w[:, :, kh, kw].T  # (Cin, Cout)
            for ho in range(H):
                hi = ho + dh
                if hi < 0 or hi >= H:
                    continue
                for wo_ in range(W):
                    wi = wo_ + dw
                    if wi < 0 or wi >= W:
                        continue
                    M[np.ix_((ci * H + hi) * W + wi,
                             (co * H + ho) * W + wo_)] += wk
    return M


def pack_params(raw, meta):
    """Pre-pack all weights into the exact layouts the fused kernel consumes."""
    H, W = meta["H"], meta["W"]
    hw = H * W
    m1 = _conv_as_dense(raw["conv1_w"], H, W, 2, 2)                     # (64, 256)
    m2 = _conv_as_dense(raw["conv2_w"], H, W, 2, 2)                     # (256, 512)
    m3 = _conv_as_dense(raw["conv3_w"], H, W, meta["conv3_ph"], 2)      # (512, 256)
    b1 = np.repeat(np.asarray(raw["conv1_b"], np.float32), hw)[None, :]  # (1, 256)
    b2 = np.repeat(np.asarray(raw["conv2_b"], np.float32), hw)[None, :]  # (1, 512)
    b3 = np.repeat(np.asarray(raw["conv3_b"], np.float32), hw)[None, :]  # (1, 256)
    wo = np.asarray(raw["out_w"], np.float32).T                          # (256, 64), in-order == (c,h,w)
    bo = np.asarray(raw["out_b"], np.float32)[None, :]                   # (1, 64)
    packed = dict(m1=m1, b1=b1, m2=m2, b2=b2, m3=m3, b3=b3, wo=wo, bo=bo)
    return {k: jnp.asarray(v) for k, v in packed.items()}


def init_params(input_size, key):
    """Deterministic init with the same tensor shapes as Policy.__init__,
    plus one-time packing into the fused-kernel layout."""
    assert input_size == 8, "reference module is only shape-consistent for input_size=8"
    kernel = 8
    padding = int((input_size - 1) / 2)
    if input_size % 2 == 0:
        kernel = 7

    ks = jax.random.split(key, 8)

    def u(k, shape, fan_in):
        bound = 1.0 / float(fan_in) ** 0.5
        return jax.random.uniform(k, shape, jnp.float32, -bound, bound)

    n = input_size * input_size
    raw = {
        "conv1_w": u(ks[0], (4, 1, 5, 5), 1 * 5 * 5),
        "conv1_b": u(ks[1], (4,), 1 * 5 * 5),
        "conv2_w": u(ks[2], (8, 4, 5, 5), 4 * 5 * 5),
        "conv2_b": u(ks[3], (8,), 4 * 5 * 5),
        "conv3_w": u(ks[4], (4, 8, kernel, 5), 8 * kernel * 5),
        "conv3_b": u(ks[5], (4,), 8 * kernel * 5),
        "out_w":   u(ks[6], (n, n * 4), n * 4),   # (out_features, in_features)
        "out_b":   u(ks[7], (n,), n * 4),
    }
    meta = {"conv3_kh": kernel, "conv3_ph": padding, "H": input_size, "W": input_size}
    return pack_params(raw, meta), raw, meta


# ---------------- pure-JAX reference (for correctness check only) -------------

def reference_forward(raw, meta, x_nchw):
    x = x_nchw.astype(jnp.float32)

    def conv(h, w, b, pad):
        y = jax.lax.conv_general_dilated(
            h, w, window_strides=(1, 1), padding=pad,
            dimension_numbers=("NCHW", "OIHW", "NCHW"))
        return jax.nn.relu(y + b[None, :, None, None])

    h = conv(x, raw["conv1_w"], raw["conv1_b"], [(2, 2), (2, 2)])
    h = conv(h, raw["conv2_w"], raw["conv2_b"], [(2, 2), (2, 2)])
    p = meta["conv3_ph"]
    h = conv(h, raw["conv3_w"], raw["conv3_b"], [(p, p), (2, 2)])
    flat = h.reshape(-1)                      # NCHW view(-1): (c, h, w) order
    logits = raw["out_w"] @ flat + raw["out_b"]
    return jax.nn.softmax(logits, axis=-1)


if __name__ == "__main__":
    input_size = 8   # the only size for which the reference module is shape-consistent
    packed, raw, meta = init_params(input_size, jax.random.PRNGKey(42))
    x = jax.random.normal(jax.random.PRNGKey(0),
                          (1, 1, input_size, input_size), jnp.float32)

    fwd = jax.jit(policy_forward)
    y = jax.block_until_ready(fwd(packed, x))

    assert y.shape == (input_size * input_size,)
    assert bool(jnp.isfinite(y).all())
    # approx reciprocal has ~2^-12 relative error -> sum-to-1 within ~2.5e-4
    assert abs(float(jnp.sum(y)) - 1.0) < 1e-3

    # cross-check the fused kernel against a plain-JAX reference forward
    y_ref = jax.block_until_ready(reference_forward(raw, meta, x))
    assert bool(jnp.allclose(y, y_ref, atol=1e-3, rtol=1e-3))

    print("KERNEL_OK")
</pallas_src>

<mosaic_0001>
module attributes {stable_mosaic.version = 11 : i64} {
  func.func @policy_fused_kernel(%arg0: memref<1x64xf32, #tpu.memory_space<vmem>>, %arg1: memref<64x256xf32, #tpu.memory_space<vmem>>, %arg2: memref<1x256xf32, #tpu.memory_space<vmem>>, %arg3: memref<256x512xf32, #tpu.memory_space<vmem>>, %arg4: memref<1x512xf32, #tpu.memory_space<vmem>>, %arg5: memref<512x256xf32, #tpu.memory_space<vmem>>, %arg6: memref<1x256xf32, #tpu.memory_space<vmem>>, %arg7: memref<256x64xf32, #tpu.memory_space<vmem>>, %arg8: memref<1x64xf32, #tpu.memory_space<vmem>>, %arg9: memref<1x64xf32, #tpu.memory_space<vmem>>) attributes {dimension_semantics = [], scalar_prefetch = 0 : i64, scratch_operands = 0 : i64, tpu.core_type = #tpu.core_type<tc>} {
    %c0 = arith.constant 0 : index
    %c0_0 = arith.constant 0 : index
    %0 = vector.load %arg0[%c0, %c0_0] : memref<1x64xf32, #tpu.memory_space<vmem>>, vector<1x64xf32>
    %c0_1 = arith.constant 0 : index
    %c0_2 = arith.constant 0 : index
    %1 = vector.load %arg1[%c0_1, %c0_2] : memref<64x256xf32, #tpu.memory_space<vmem>>, vector<64x256xf32>
    %cst = arith.constant dense<0.000000e+00> : vector<1x256xf32>
    %2 = tpu.matmul %0, %1, %cst {dimension_numbers = #tpu.dot_dimension_numbers<[1], [0], [0], [1], [0, 0, 1, 1], [], []>} : vector<1x64xf32>, vector<64x256xf32>, vector<1x256xf32> -> vector<1x256xf32>
    %c0_3 = arith.constant 0 : index
    %c0_4 = arith.constant 0 : index
    %3 = vector.load %arg2[%c0_3, %c0_4] : memref<1x256xf32, #tpu.memory_space<vmem>>, vector<1x256xf32>
    %4 = arith.addf %2, %3 : vector<1x256xf32>
    %cst_5 = arith.constant 0.000000e+00 : f32
    %5 = vector.broadcast %cst_5 : f32 to vector<1x256xf32>
    %6 = arith.maximumf %4, %5 : vector<1x256xf32>
    %c0_6 = arith.constant 0 : index
    %c0_7 = arith.constant 0 : index
    %7 = vector.load %arg3[%c0_6, %c0_7] : memref<256x512xf32, #tpu.memory_space<vmem>>, vector<256x512xf32>
    %cst_8 = arith.constant dense<0.000000e+00> : vector<1x512xf32>
    %8 = tpu.matmul %6, %7, %cst_8 {dimension_numbers = #tpu.dot_dimension_numbers<[1], [0], [0], [1], [0, 0, 1, 1], [], []>} : vector<1x256xf32>, vector<256x512xf32>, vector<1x512xf32> -> vector<1x512xf32>
    %c0_9 = arith.constant 0 : index
    %c0_10 = arith.constant 0 : index
    %9 = vector.load %arg4[%c0_9, %c0_10] : memref<1x512xf32, #tpu.memory_space<vmem>>, vector<1x512xf32>
    %10 = arith.addf %8, %9 : vector<1x512xf32>
    %cst_11 = arith.constant 0.000000e+00 : f32
    %11 = vector.broadcast %cst_11 : f32 to vector<1x512xf32>
    %12 = arith.maximumf %10, %11 : vector<1x512xf32>
    %c0_12 = arith.constant 0 : index
    %c0_13 = arith.constant 0 : index
    %13 = vector.load %arg5[%c0_12, %c0_13] : memref<512x256xf32, #tpu.memory_space<vmem>>, vector<512x256xf32>
    %cst_14 = arith.constant dense<0.000000e+00> : vector<1x256xf32>
    %14 = tpu.matmul %12, %13, %cst_14 {dimension_numbers = #tpu.dot_dimension_numbers<[1], [0], [0], [1], [0, 0, 1, 1], [], []>} : vector<1x512xf32>, vector<512x256xf32>, vector<1x256xf32> -> vector<1x256xf32>
    %c0_15 = arith.constant 0 : index
    %c0_16 = arith.constant 0 : index
    %15 = vector.load %arg6[%c0_15, %c0_16] : memref<1x256xf32, #tpu.memory_space<vmem>>, vector<1x256xf32>
    %16 = arith.addf %14, %15 : vector<1x256xf32>
    %cst_17 = arith.constant 0.000000e+00 : f32
    %17 = vector.broadcast %cst_17 : f32 to vector<1x256xf32>
    %18 = arith.maximumf %16, %17 : vector<1x256xf32>
    %c0_18 = arith.constant 0 : index
    %c0_19 = arith.constant 0 : index
    %19 = vector.load %arg7[%c0_18, %c0_19] : memref<256x64xf32, #tpu.memory_space<vmem>>, vector<256x64xf32>
    %cst_20 = arith.constant dense<0.000000e+00> : vector<1x64xf32>
    %20 = tpu.matmul %18, %19, %cst_20 {dimension_numbers = #tpu.dot_dimension_numbers<[1], [0], [0], [1], [0, 0, 1, 1], [], []>} : vector<1x256xf32>, vector<256x64xf32>, vector<1x64xf32> -> vector<1x64xf32>
    %c0_21 = arith.constant 0 : index
    %c0_22 = arith.constant 0 : index
    %21 = vector.load %arg8[%c0_21, %c0_22] : memref<1x64xf32, #tpu.memory_space<vmem>>, vector<1x64xf32>
    %22 = arith.addf %20, %21 : vector<1x64xf32>
    %cst_23 = arith.constant dense<0xFF800000> : vector<1xf32>
    %23 = vector.multi_reduction <maximumf>, %22, %cst_23 [1] : vector<1x64xf32> to vector<1xf32>
    %24 = vector.shape_cast %23 : vector<1xf32> to vector<1x1xf32>
    %25 = vector.broadcast %24 : vector<1x1xf32> to vector<1x64xf32>
    %26 = arith.subf %22, %25 : vector<1x64xf32>
    %27 = math.exp %26 : vector<1x64xf32>
    %cst_24 = arith.constant dense<0.000000e+00> : vector<1xf32>
    %28 = vector.multi_reduction <add>, %27, %cst_24 [1] : vector<1x64xf32> to vector<1xf32>
    %29 = vector.shape_cast %28 : vector<1xf32> to vector<1x1xf32>
    %30 = tpu.reciprocal %29 {approx = true} : vector<1x1xf32> -> vector<1x1xf32>
    %31 = vector.broadcast %30 : vector<1x1xf32> to vector<1x64xf32>
    %32 = arith.mulf %27, %31 : vector<1x64xf32>
    %c0_25 = arith.constant 0 : index
    %c0_26 = arith.constant 0 : index
    %33 = vector.load %arg9[%c0_25, %c0_26] : memref<1x64xf32, #tpu.memory_space<vmem>>, vector<1x64xf32>
    tpu.vector_store %arg9[%c0_25, %c0_26], %32 {strides = array<i32>} : memref<1x64xf32, #tpu.memory_space<vmem>>, vector<1x64xf32>,
    return
  }
}

</mosaic_0001>

<llo_original>
// kernel: policy_forward.1
$region0: #{policy_forward.1}
  #allocation0 [shape = 'u32[]', space=smem, size = 0x4, offset = 0x4, fixed_abs, tag = 'smem constant byte address 0x4 - core index']
  #allocation1 [shape = 'u32[72,128]{1,0:T(1,128)}', space=vmem, size = 0x9000, scoped, tag = 'internal scratch']
  %s0 = inlined_call_operand.vmem [shape: f32[1,64], index: 0, kind: input, shape index: {}]
  %s1 = inlined_call_operand.vmem [shape: f32[64,256], index: 1, kind: input, shape index: {}]
  %s2 = inlined_call_operand.vmem [shape: f32[1,256], index: 2, kind: input, shape index: {}]
  %s3 = inlined_call_operand.hbm [shape: f32[256,512], index: 3, kind: input, shape index: {}]
  %s4 = inlined_call_operand.vmem [shape: f32[1,512], index: 4, kind: input, shape index: {}]
  %s5 = inlined_call_operand.hbm [shape: f32[512,256], index: 5, kind: input, shape index: {}]
  %s6 = inlined_call_operand.vmem [shape: f32[1,256], index: 6, kind: input, shape index: {}]
  %s7 = inlined_call_operand.vmem [shape: f32[256,64], index: 7, kind: input, shape index: {}]
  %s8 = inlined_call_operand.vmem [shape: f32[1,64], index: 8, kind: input, shape index: {}]
  %s9 = inlined_call_operand.hbm [shape: f32[1,64], index: 9, kind: output, shape index: {}]
  %s10 = sld [smem:[#allocation0]]
  $region54: #{policy_forward.1} parent=0
    _
  %s12 = ssub.s32 1, %s10
  %s13 = scalar_select 0, %s12, %s10
  $region1: #{policy_forward.1} parent=0
    #allocation2 [shape = 'u8[524288]{0}', space=vmem, size = 0x80000, scoped, tag = 'input window, operand 3, single buffered']
    #allocation3 [shape = 's32[1]{0}', space=sflag, size = 0x4, scoped, tag = 'scoped memory for policy_forward.1']
    #allocation4 [shape = 's32[1]{0}', space=sflag, size = 0x4, scoped, tag = 'scoped memory for policy_forward.1']
    #allocation5 [shape = 'u8[524288]{0}', space=vmem, size = 0x80000, scoped, tag = 'input window, operand 5, single buffered']
    #allocation6 [shape = 's32[1]{0}', space=sflag, size = 0x4, scoped, tag = 'scoped memory for policy_forward.1']
    #allocation7 [shape = 'u8[512]{0}', space=vmem, size = 0x400, scoped, tag = 'output window, operand 0, single buffered']
    %14 = vsyncpa [#allocation3], 0
    %15 = vsyncpa [#allocation6], 0
    %16 = vsyncpa [#allocation4], 0
    // Predicated region
    $region2: #{policy_forward.1} parent=1 // pred_check
      _
    $region3: #{policy_forward.1} parent=1 // pred_check_branch
      %18 = sbr.rel (0) target = $region5
    $region4: #{policy_forward.1} parent=1 // pred_region
      _
    $region5: #{policy_forward.1} parent=1 // pred_fallthru
      _
    // Predicated region
    $region6: #{policy_forward.1} parent=1 // pred_check
      _
    $region7: #{policy_forward.1} parent=1 // pred_check_branch
      %20 = sbr.rel (0) target = $region9
    $region8: #{policy_forward.1} parent=1 // pred_region
      _
    $region9: #{policy_forward.1} parent=1 // pred_fallthru
      _
    // Predicated region
    $region10: #{policy_forward.1} parent=1 // pred_check
      _
    $region11: #{policy_forward.1} parent=1 // pred_check_branch
      %22 = sbr.rel (0) target = $region13
    $region12: #{policy_forward.1} parent=1 // pred_region
      _
    $region13: #{policy_forward.1} parent=1 // pred_fallthru
      _
    // Predicated region
    $region14: #{policy_forward.1} parent=1 // pred_check
      _
    $region15: #{policy_forward.1} parent=1 // pred_check_branch
      %24 = sbr.rel (0) target = $region17
    $region16: #{policy_forward.1} parent=1 // pred_region
      %26 = vsyncadd [#allocation3], 0
      %s27 = sshll.u32 %s3, 4
      %s28 = int_to_ptr.hbm [resolvable:$true] %s27
      %s29 = sshll.u32 [#allocation2], 4
      %s30 = int_to_ptr.vmem [resolvable:$true] %s29
      %35 = dma.hbm_to_vmem [thread:$0]  %s28, 16384, %s30, [#allocation3], 512, 512, 32
    $region17: #{policy_forward.1} parent=1 // pred_fallthru
      _
    // Predicated region
    $region18: #{policy_forward.1} parent=1 // pred_check
      _
    $region19: #{policy_forward.1} parent=1 // pred_check_branch
      %37 = sbr.rel (0) target = $region21
    $region20: #{policy_forward.1} parent=1 // pred_region
      _
    $region21: #{policy_forward.1} parent=1 // pred_fallthru
      _
    // Predicated region
    $region22: #{policy_forward.1} parent=1 // pred_check
      _
    $region23: #{policy_forward.1} parent=1 // pred_check_branch
      %39 = sbr.rel (0) target = $region25
    $region24: #{policy_forward.1} parent=1 // pred_region
      %41 = vsyncadd [#allocation6], 0
      %s42 = sshll.u32 %s5, 4
      %s43 = int_to_ptr.hbm [resolvable:$true] %s42
      %s44 = sshll.u32 [#allocation5], 4
      %s45 = int_to_ptr.vmem [resolvable:$true] %s44
      %50 = dma.hbm_to_vmem [thread:$0]  %s43, 16384, %s45, [#allocation6], 256, 256, 16
    $region25: #{policy_forward.1} parent=1 // pred_fallthru
      _
    // Predicated region
    $region26: #{policy_forward.1} parent=1 // pred_check
      _
    $region27: #{policy_forward.1} parent=1 // pred_check_branch
      %52 = sbr.rel (0) target = $region29
    $region28: #{policy_forward.1} parent=1 // pred_region
      _
    $region29: #{policy_forward.1} parent=1 // pred_fallthru
      _
    // Predicated region
    $region30: #{policy_forward.1} parent=1 // pred_check
      _
    $region31: #{policy_forward.1} parent=1 // pred_check_branch
      %54 = sbr.rel (0) target = $region33
    $region32: #{policy_forward.1} parent=1 // pred_region
      _
    $region33: #{policy_forward.1} parent=1 // pred_fallthru
      _
    // Predicated region
    $region34: #{policy_forward.1} parent=1 // pred_check
      _
    $region35: #{policy_forward.1} parent=1 // pred_check_branch
      %56 = sbr.rel (0) target = $region37
    $region36: #{policy_forward.1} parent=1 // pred_region
      _
    $region37: #{policy_forward.1} parent=1 // pred_fallthru
      _
    // Predicated region
    $region38: #{policy_forward.1} parent=1 // pred_check
      _
    $region39: #{policy_forward.1} parent=1 // pred_check_branch
      %58 = sbr.rel (0) target = $region41
    $region40: #{policy_forward.1} parent=1 // pred_region
      %60 = dma.done [#allocation3], 16384
    $region41: #{policy_forward.1} parent=1 // pred_fallthru
      _
    // Predicated region
    $region42: #{policy_forward.1} parent=1 // pred_check
      _
    $region43: #{policy_forward.1} parent=1 // pred_check_branch
      %62 = sbr.rel (0) target = $region45
    $region44: #{policy_forward.1} parent=1 // pred_region
      %64 = dma.done [#allocation6], 16384
    $region45: #{policy_forward.1} parent=1 // pred_fallthru
      _
    %v65 = vld [vmem:[%s0] sm:$0x1]
    %v66 = vld [vmem:[%s1] sm:$0xff]
    %v67 = vld [vmem:[%s1 + $0x8] sm:$0xff]
    %v68 = vld [vmem:[%s1 + $0x10] sm:$0xff]
    %v69 = vld [vmem:[%s1 + $0x18] sm:$0xff]
    %v70 = vld [vmem:[%s1 + $0x20] sm:$0xff]
    %v71 = vld [vmem:[%s1 + $0x28] sm:$0xff]
    %v72 = vld [vmem:[%s1 + $0x30] sm:$0xff]
    %v73 = vld [vmem:[%s1 + $0x38] sm:$0xff]
    %v74 = vld [vmem:[%s1 + $0x40] sm:$0xff]
    %v75 = vld [vmem:[%s1 + $0x48] sm:$0xff]
    %v76 = vld [vmem:[%s1 + $0x50] sm:$0xff]
    %v77 = vld [vmem:[%s1 + $0x58] sm:$0xff]
    %v78 = vld [vmem:[%s1 + $0x60] sm:$0xff]
    %v79 = vld [vmem:[%s1 + $0x68] sm:$0xff]
    %v80 = vld [vmem:[%s1 + $0x70] sm:$0xff]
    %v81 = vld [vmem:[%s1 + $0x78] sm:$0xff]
    %v82 = vld [vmem:[%s2] sm:$0x3]
    %v84 = vperm.slane %v82, 0
    %v85 = vperm.slane %v82, 1
    %vm88 = vcmask 523264
    %v90 = vsel %vm88, %v65, 0
    %92 = vmatpush.msra.mxu0 0.0
    %93 = vmatpush.msra.mxu0 0.0
    %94 = vmatpush.msra.mxu0 0.0
    %95 = vmatpush.msra.mxu0 0.0
    %96 = vmatpush.msra.mxu0 0.0
    %97 = vmatpush.msra.mxu0 0.0
    %98 = vmatpush.msra.mxu0 0.0
    %99 = vmatpush.msra.mxu0 0.0
    %100 = vmatpush.msra.mxu0 %v80
    %101 = vmatpush.msra.mxu0 %v78
    %102 = vmatpush.msra.mxu0 %v76
    %103 = vmatpush.msra.mxu0 %v74
    %104 = vmatpush.msra.mxu0 %v72
    %105 = vmatpush.msra.mxu0 %v70
    %106 = vmatpush.msra.mxu0 %v68
    %107 = vmatpush.msra.mxu0 %v66
    %108 = vmatmul.f32.gmra.mxu0 %v90
    %v109 = vpop.f32.mrf.mxu0
    %v110 = vadd.f32 %v84, %v109
    %111 = vdwg.mxu0
    %112 = vmatpush.msra.mxu0 0.0
    %113 = vmatpush.msra.mxu0 0.0
    %114 = vmatpush.msra.mxu0 0.0
    %115 = vmatpush.msra.mxu0 0.0
    %116 = vmatpush.msra.mxu0 0.0
    %117 = vmatpush.msra.mxu0 0.0
    %118 = vmatpush.msra.mxu0 0.0
    %119 = vmatpush.msra.mxu0 0.0
    %120 = vmatpush.msra.mxu0 %v81
    %121 = vmatpush.msra.mxu0 %v79
    %122 = vmatpush.msra.mxu0 %v77
    %123 = vmatpush.msra.mxu0 %v75
    %124 = vmatpush.msra.mxu0 %v73
    %125 = vmatpush.msra.mxu0 %v71
    %126 = vmatpush.msra.mxu0 %v69
    %127 = vmatpush.msra.mxu0 %v67
    %128 = vmatmul.f32.gmra.mxu0 %v90
    %v129 = vpop.f32.mrf.mxu0
    %v130 = vadd.f32 %v85, %v129
    %131 = vdwg.mxu0
    %v132 = vmax.f32 %v110, 0.0
    %v133 = vmax.f32 %v130, 0.0
    %v134 = vld [vmem:[#allocation2] sm:$0xff]
    %v135 = vld [vmem:[#allocation2 + $0x8] sm:$0xff]
    %v136 = vld [vmem:[#allocation2 + $0x10] sm:$0xff]
    %v137 = vld [vmem:[#allocation2 + $0x18] sm:$0xff]
    %v138 = vld [vmem:[#allocation2 + $0x20] sm:$0xff]
    %v139 = vld [vmem:[#allocation2 + $0x28] sm:$0xff]
    %v140 = vld [vmem:[#allocation2 + $0x30] sm:$0xff]
    %v141 = vld [vmem:[#allocation2 + $0x38] sm:$0xff]
    %v142 = vld [vmem:[#allocation2 + $0x40] sm:$0xff]
    %v143 = vld [vmem:[#allocation2 + $0x48] sm:$0xff]
    %v144 = vld [vmem:[#allocation2 + $0x50] sm:$0xff]
    %v145 = vld [vmem:[#allocation2 + $0x58] sm:$0xff]
    %v146 = vld [vmem:[#allocation2 + $0x60] sm:$0xff]
    %v147 = vld [vmem:[#allocation2 + $0x68] sm:$0xff]
    %v148 = vld [vmem:[#allocation2 + $0x70] sm:$0xff]
    %v149 = vld [vmem:[#allocation2 + $0x78] sm:$0xff]
    %v150 = vld [vmem:[#allocation2 + $0x80] sm:$0xff]
    %v151 = vld [vmem:[#allocation2 + $0x88] sm:$0xff]
    %v152 = vld [vmem:[#allocation2 + $0x90] sm:$0xff]
    %v153 = vld [vmem:[#allocation2 + $0x98] sm:$0xff]
    %v154 = vld [vmem:[#allocation2 + $0xa0] sm:$0xff]
    %v155 = vld [vmem:[#allocation2 + $0xa8] sm:$0xff]
    %v156 = vld [vmem:[#allocation2 + $0xb0] sm:$0xff]
    %v157 = vld [vmem:[#allocation2 + $0xb8] sm:$0xff]
    %v158 = vld [vmem:[#allocation2 + $0xc0] sm:$0xff]
    %v159 = vld [vmem:[#allocation2 + $0xc8] sm:$0xff]
    %v160 = vld [vmem:[#allocation2 + $0xd0] sm:$0xff]
    %v161 = vld [vmem:[#allocation2 + $0xd8] sm:$0xff]
    %v162 = vld [vmem:[#allocation2 + $0xe0] sm:$0xff]
    %v163 = vld [vmem:[#allocation2 + $0xe8] sm:$0xff]
    %v164 = vld [vmem:[#allocation2 + $0xf0] sm:$0xff]
    %v165 = vld [vmem:[#allocation2 + $0xf8] sm:$0xff]
    %v166 = vld [vmem:[#allocation2 + $0x100] sm:$0xff]
    %v167 = vld [vmem:[#allocation2 + $0x108] sm:$0xff]
    %v168 = vld [vmem:[#allocation2 + $0x110] sm:$0xff]
    %v169 = vld [vmem:[#allocation2 + $0x118] sm:$0xff]
    %v170 = vld [vmem:[#allocation2 + $0x120] sm:$0xff]
    %v171 = vld [vmem:[#allocation2 + $0x128] sm:$0xff]
    %v172 = vld [vmem:[#allocation2 + $0x130] sm:$0xff]
    %v173 = vld [vmem:[#allocation2 + $0x138] sm:$0xff]
    %v174 = vld [vmem:[#allocation2 + $0x140] sm:$0xff]
    %v175 = vld [vmem:[#allocation2 + $0x148] sm:$0xff]
    %v176 = vld [vmem:[#allocation2 + $0x150] sm:$0xff]
    %v177 = vld [vmem:[#allocation2 + $0x158] sm:$0xff]
    %v178 = vld [vmem:[#allocation2 + $0x160] sm:$0xff]
    %v179 = vld [vmem:[#allocation2 + $0x168] sm:$0xff]
    %v180 = vld [vmem:[#allocation2 + $0x170] sm:$0xff]
    %v181 = vld [vmem:[#allocation2 + $0x178] sm:$0xff]
    %v182 = vld [vmem:[#allocation2 + $0x180] sm:$0xff]
    %v183 = vld [vmem:[#allocation2 + $0x188] sm:$0xff]
    %v184 = vld [vmem:[#allocation2 + $0x190] sm:$0xff]
    %v185 = vld [vmem:[#allocation2 + $0x198] sm:$0xff]
    %v186 = vld [vmem:[#allocation2 + $0x1a0] sm:$0xff]
    %v187 = vld [vmem:[#allocation2 + $0x1a8] sm:$0xff]
    %v188 = vld [vmem:[#allocation2 + $0x1b0] sm:$0xff]
    %v189 = vld [vmem:[#allocation2 + $0x1b8] sm:$0xff]
    %v190 = vld [vmem:[#allocation2 + $0x1c0] sm:$0xff]
    %v191 = vld [vmem:[#allocation2 + $0x1c8] sm:$0xff]
    %v192 = vld [vmem:[#allocation2 + $0x1d0] sm:$0xff]
    %v193 = vld [vmem:[#allocation2 + $0x1d8] sm:$0xff]
    %v194 = vld [vmem:[#allocation2 + $0x1e0] sm:$0xff]
    %v195 = vld [vmem:[#allocation2 + $0x1e8] sm:$0xff]
    %v196 = vld [vmem:[#allocation2 + $0x1f0] sm:$0xff]
    %v197 = vld [vmem:[#allocation2 + $0x1f8] sm:$0xff]
    %v198 = vld [vmem:[#allocation2 + $0x200] sm:$0xff]
    %v199 = vld [vmem:[#allocation2 + $0x208] sm:$0xff]
    %v200 = vld [vmem:[#allocation2 + $0x210] sm:$0xff]
    %v201 = vld [vmem:[#allocation2 + $0x218] sm:$0xff]
    %v202 = vld [vmem:[#allocation2 + $0x220] sm:$0xff]
    %v203 = vld [vmem:[#allocation2 + $0x228] sm:$0xff]
    %v204 = vld [vmem:[#allocation2 + $0x230] sm:$0xff]
    %v205 = vld [vmem:[#allocation2 + $0x238] sm:$0xff]
    %v206 = vld [vmem:[#allocation2 + $0x240] sm:$0xff]
    %v207 = vld [vmem:[#allocation2 + $0x248] sm:$0xff]
    %v208 = vld [vmem:[#allocation2 + $0x250] sm:$0xff]
    %v209 = vld [vmem:[#allocation2 + $0x258] sm:$0xff]
    %v210 = vld [vmem:[#allocation2 + $0x260] sm:$0xff]
    %v211 = vld [vmem:[#allocation2 + $0x268] sm:$0xff]
    %v212 = vld [vmem:[#allocation2 + $0x270] sm:$0xff]
    %v213 = vld [vmem:[#allocation2 + $0x278] sm:$0xff]
    %v214 = vld [vmem:[#allocation2 + $0x280] sm:$0xff]
    %v215 = vld [vmem:[#allocation2 + $0x288] sm:$0xff]
    %v216 = vld [vmem:[#allocation2 + $0x290] sm:$0xff]
    %v217 = vld [vmem:[#allocation2 + $0x298] sm:$0xff]
    %v218 = vld [vmem:[#allocation2 + $0x2a0] sm:$0xff]
    %v219 = vld [vmem:[#allocation2 + $0x2a8] sm:$0xff]
    %v220 = vld [vmem:[#allocation2 + $0x2b0] sm:$0xff]
    %v221 = vld [vmem:[#allocation2 + $0x2b8] sm:$0xff]
    %v222 = vld [vmem:[#allocation2 + $0x2c0] sm:$0xff]
    %v223 = vld [vmem:[#allocation2 + $0x2c8] sm:$0xff]
    %v224 = vld [vmem:[#allocation2 + $0x2d0] sm:$0xff]
    %v225 = vld [vmem:[#allocation2 + $0x2d8] sm:$0xff]
    %v226 = vld [vmem:[#allocation2 + $0x2e0] sm:$0xff]
    %v227 = vld [vmem:[#allocation2 + $0x2e8] sm:$0xff]
    %v228 = vld [vmem:[#allocation2 + $0x2f0] sm:$0xff]
    %v229 = vld [vmem:[#allocation2 + $0x2f8] sm:$0xff]
    %v230 = vld [vmem:[#allocation2 + $0x300] sm:$0xff]
    %v231 = vld [vmem:[#allocation2 + $0x308] sm:$0xff]
    %v232 = vld [vmem:[#allocation2 + $0x310] sm:$0xff]
    %v233 = vld [vmem:[#allocation2 + $0x318] sm:$0xff]
    %v234 = vld [vmem:[#allocation2 + $0x320] sm:$0xff]
    %v235 = vld [vmem:[#allocation2 + $0x328] sm:$0xff]
    %v236 = vld [vmem:[#allocation2 + $0x330] sm:$0xff]
    %v237 = vld [vmem:[#allocation2 + $0x338] sm:$0xff]
    %v238 = vld [vmem:[#allocation2 + $0x340] sm:$0xff]
    %v239 = vld [vmem:[#allocation2 + $0x348] sm:$0xff]
    %v240 = vld [vmem:[#allocation2 + $0x350] sm:$0xff]
    %v241 = vld [vmem:[#allocation2 + $0x358] sm:$0xff]
    %v242 = vld [vmem:[#allocation2 + $0x360] sm:$0xff]
    %v243 = vld [vmem:[#allocation2 + $0x368] sm:$0xff]
    %v244 = vld [vmem:[#allocation2 + $0x370] sm:$0xff]
    %v245 = vld [vmem:[#allocation2 + $0x378] sm:$0xff]
    %v246 = vld [vmem:[#allocation2 + $0x380] sm:$0xff]
    %v247 = vld [vmem:[#allocation2 + $0x388] sm:$0xff]
    %v248 = vld [vmem:[#allocation2 + $0x390] sm:$0xff]
    %v249 = vld [vmem:[#allocation2 + $0x398] sm:$0xff]
    %v250 = vld [vmem:[#allocation2 + $0x3a0] sm:$0xff]
    %v251 = vld [vmem:[#allocation2 + $0x3a8] sm:$0xff]
    %v252 = vld [vmem:[#allocation2 + $0x3b0] sm:$0xff]
    %v253 = vld [vmem:[#allocation2 + $0x3b8] sm:$0xff]
    %v254 = vld [vmem:[#allocation2 + $0x3c0] sm:$0xff]
    %v255 = vld [vmem:[#allocation2 + $0x3c8] sm:$0xff]
    %v256 = vld [vmem:[#allocation2 + $0x3d0] sm:$0xff]
    %v257 = vld [vmem:[#allocation2 + $0x3d8] sm:$0xff]
    %v258 = vld [vmem:[#allocation2 + $0x3e0] sm:$0xff]
    %v259 = vld [vmem:[#allocation2 + $0x3e8] sm:$0xff]
    %v260 = vld [vmem:[#allocation2 + $0x3f0] sm:$0xff]
    %v261 = vld [vmem:[#allocation2 + $0x3f8] sm:$0xff]
    %v262 = vld [vmem:[%s4] sm:$0xf]
    %v264 = vperm.slane %v262, 0
    %v265 = vperm.slane %v262, 1
    %v266 = vperm.slane %v262, 2
    %v267 = vperm.slane %v262, 3
    %272 = vmatpush.msra.mxu0 %v194
    %273 = vmatpush.msra.mxu0 %v190
    %274 = vmatpush.msra.mxu0 %v186
    %275 = vmatpush.msra.mxu0 %v182
    %276 = vmatpush.msra.mxu0 %v178
    %277 = vmatpush.msra.mxu0 %v174
    %278 = vmatpush.msra.mxu0 %v170
    %279 = vmatpush.msra.mxu0 %v166
    %280 = vmatpush.msra.mxu0 %v162
    %281 = vmatpush.msra.mxu0 %v158
    %282 = vmatpush.msra.mxu0 %v154
    %283 = vmatpush.msra.mxu0 %v150
    %284 = vmatpush.msra.mxu0 %v146
    %285 = vmatpush.msra.mxu0 %v142
    %286 = vmatpush.msra.mxu0 %v138
    %287 = vmatpush.msra.mxu0 %v134
    %288 = vmatmul.f32.gmra.mxu0 %v132
    %v289 = vpop.f32.mrf.mxu0
    %v290 = vadd.f32 %v264, %v289
    %291 = vdwg.mxu0
    %292 = vmatpush.msra.mxu0 %v258
    %293 = vmatpush.msra.mxu0 %v254
    %294 = vmatpush.msra.mxu0 %v250
    %295 = vmatpush.msra.mxu0 %v246
    %296 = vmatpush.msra.mxu0 %v242
    %297 = vmatpush.msra.mxu0 %v238
    %298 = vmatpush.msra.mxu0 %v234
    %299 = vmatpush.msra.mxu0 %v230
    %300 = vmatpush.msra.mxu0 %v226
    %301 = vmatpush.msra.mxu0 %v222
    %302 = vmatpush.msra.mxu0 %v218
    %303 = vmatpush.msra.mxu0 %v214
    %304 = vmatpush.msra.mxu0 %v210
    %305 = vmatpush.msra.mxu0 %v206
    %306 = vmatpush.msra.mxu0 %v202
    %307 = vmatpush.msra.mxu0 %v198
    %308 = vmatmul.f32.gmra.mxu0 %v133
    %v309 = vpop.f32.mrf.mxu0
    %v310 = vadd.f32 %v290, %v309
    %311 = vdwg.mxu0
    %312 = vmatpush.msra.mxu0 %v195
    %313 = vmatpush.msra.mxu0 %v191
    %314 = vmatpush.msra.mxu0 %v187
    %315 = vmatpush.msra.mxu0 %v183
    %316 = vmatpush.msra.mxu0 %v179
    %317 = vmatpush.msra.mxu0 %v175
    %318 = vmatpush.msra.mxu0 %v171
    %319 = vmatpush.msra.mxu0 %v167
    %320 = vmatpush.msra.mxu0 %v163
    %321 = vmatpush.msra.mxu0 %v159
    %322 = vmatpush.msra.mxu0 %v155
    %323 = vmatpush.msra.mxu0 %v151
    %324 = vmatpush.msra.mxu0 %v147
    %325 = vmatpush.msra.mxu0 %v143
    %326 = vmatpush.msra.mxu0 %v139
    %327 = vmatpush.msra.mxu0 %v135
    %328 = vmatmul.f32.gmra.mxu0 %v132
    %v329 = vpop.f32.mrf.mxu0
    %v330 = vadd.f32 %v265, %v329
    %331 = vdwg.mxu0
    %332 = vmatpush.msra.mxu0 %v259
    %333 = vmatpush.msra.mxu0 %v255
    %334 = vmatpush.msra.mxu0 %v251
    %335 = vmatpush.msra.mxu0 %v247
    %336 = vmatpush.msra.mxu0 %v243
    %337 = vmatpush.msra.mxu0 %v239
    %338 = vmatpush.msra.mxu0 %v235
    %339 = vmatpush.msra.mxu0 %v231
    %340 = vmatpush.msra.mxu0 %v227
    %341 = vmatpush.msra.mxu0 %v223
    %342 = vmatpush.msra.mxu0 %v219
    %343 = vmatpush.msra.mxu0 %v215
    %344 = vmatpush.msra.mxu0 %v211
    %345 = vmatpush.msra.mxu0 %v207
    %346 = vmatpush.msra.mxu0 %v203
    %347 = vmatpush.msra.mxu0 %v199
    %348 = vmatmul.f32.gmra.mxu0 %v133
    %v349 = vpop.f32.mrf.mxu0
    %v350 = vadd.f32 %v330, %v349
    %351 = vdwg.mxu0
    %352 = vmatpush.msra.mxu0 %v196
    %353 = vmatpush.msra.mxu0 %v192
    %354 = vmatpush.msra.mxu0 %v188
    %355 = vmatpush.msra.mxu0 %v184
    %356 = vmatpush.msra.mxu0 %v180
    %357 = vmatpush.msra.mxu0 %v176
    %358 = vmatpush.msra.mxu0 %v172
    %359 = vmatpush.msra.mxu0 %v168
    %360 = vmatpush.msra.mxu0 %v164
    %361 = vmatpush.msra.mxu0 %v160
    %362 = vmatpush.msra.mxu0 %v156
    %363 = vmatpush.msra.mxu0 %v152
    %364 = vmatpush.msra.mxu0 %v148
    %365 = vmatpush.msra.mxu0 %v144
    %366 = vmatpush.msra.mxu0 %v140
    %367 = vmatpush.msra.mxu0 %v136
    %368 = vmatmul.f32.gmra.mxu0 %v132
    %v369 = vpop.f32.mrf.mxu0
    %v370 = vadd.f32 %v266, %v369
    %371 = vdwg.mxu0
    %372 = vmatpush.msra.mxu0 %v260
    %373 = vmatpush.msra.mxu0 %v256
    %374 = vmatpush.msra.mxu0 %v252
    %375 = vmatpush.msra.mxu0 %v248
    %376 = vmatpush.msra.mxu0 %v244
    %377 = vmatpush.msra.mxu0 %v240
    %378 = vmatpush.msra.mxu0 %v236
    %379 = vmatpush.msra.mxu0 %v232
    %380 = vmatpush.msra.mxu0 %v228
    %381 = vmatpush.msra.mxu0 %v224
    %382 = vmatpush.msra.mxu0 %v220
    %383 = vmatpush.msra.mxu0 %v216
    %384 = vmatpush.msra.mxu0 %v212
    %385 = vmatpush.msra.mxu0 %v208
    %386 = vmatpush.msra.mxu0 %v204
    %387 = vmatpush.msra.mxu0 %v200
    %388 = vmatmul.f32.gmra.mxu0 %v133
    %v389 = vpop.f32.mrf.mxu0
    %v390 = vadd.f32 %v370, %v389
    %391 = vdwg.mxu0
    %392 = vmatpush.msra.mxu0 %v197
    %393 = vmatpush.msra.mxu0 %v193
    %394 = vmatpush.msra.mxu0 %v189
    %395 = vmatpush.msra.mxu0 %v185
    %396 = vmatpush.msra.mxu0 %v181
    %397 = vmatpush.msra.mxu0 %v177
    %398 = vmatpush.msra.mxu0 %v173
    %399 = vmatpush.msra.mxu0 %v169
    %400 = vmatpush.msra.mxu0 %v165
    %401 = vmatpush.msra.mxu0 %v161
    %402 = vmatpush.msra.mxu0 %v157
    %403 = vmatpush.msra.mxu0 %v153
    %404 = vmatpush.msra.mxu0 %v149
    %405 = vmatpush.msra.mxu0 %v145
    %406 = vmatpush.msra.mxu0 %v141
    %407 = vmatpush.msra.mxu0 %v137
    %408 = vmatmul.f32.gmra.mxu0 %v132
    %v409 = vpop.f32.mrf.mxu0
    %v410 = vadd.f32 %v267, %v409
    %411 = vdwg.mxu0
    %412 = vmatpush.msra.mxu0 %v261
    %413 = vmatpush.msra.mxu0 %v257
    %414 = vmatpush.msra.mxu0 %v253
    %415 = vmatpush.msra.mxu0 %v249
    %416 = vmatpush.msra.mxu0 %v245
    %417 = vmatpush.msra.mxu0 %v241
    %418 = vmatpush.msra.mxu0 %v237
    %419 = vmatpush.msra.mxu0 %v233
    %420 = vmatpush.msra.mxu0 %v229
    %421 = vmatpush.msra.mxu0 %v225
    %422 = vmatpush.msra.mxu0 %v221
    %423 = vmatpush.msra.mxu0 %v217
    %424 = vmatpush.msra.mxu0 %v213
    %425 = vmatpush.msra.mxu0 %v209
    %426 = vmatpush.msra.mxu0 %v205
    %427 = vmatpush.msra.mxu0 %v201
    %428 = vmatmul.f32.gmra.mxu0 %v133
    %v429 = vpop.f32.mrf.mxu0
    %v430 = vadd.f32 %v410, %v429
    %431 = vdwg.mxu0
    %v432 = vmax.f32 %v310, 0.0
    %v433 = vmax.f32 %v350, 0.0
    %v434 = vmax.f32 %v390, 0.0
    %v435 = vmax.f32 %v430, 0.0
    %v436 = vld [vmem:[#allocation5] sm:$0xff]
    %v437 = vld [vmem:[#allocation5 + $0x8] sm:$0xff]
    %v438 = vld [vmem:[#allocation5 + $0x10] sm:$0xff]
    %v439 = vld [vmem:[#allocation5 + $0x18] sm:$0xff]
    %v440 = vld [vmem:[#allocation5 + $0x20] sm:$0xff]
    %v441 = vld [vmem:[#allocation5 + $0x28] sm:$0xff]
    %v442 = vld [vmem:[#allocation5 + $0x30] sm:$0xff]
    %v443 = vld [vmem:[#allocation5 + $0x38] sm:$0xff]
    %v444 = vld [vmem:[#allocation5 + $0x40] sm:$0xff]
    %v445 = vld [vmem:[#allocation5 + $0x48] sm:$0xff]
    %v446 = vld [vmem:[#allocation5 + $0x50] sm:$0xff]
    %v447 = vld [vmem:[#allocation5 + $0x58] sm:$0xff]
    %v448 = vld [vmem:[#allocation5 + $0x60] sm:$0xff]
    %v449 = vld [vmem:[#allocation5 + $0x68] sm:$0xff]
    %v450 = vld [vmem:[#allocation5 + $0x70] sm:$0xff]
    %v451 = vld [vmem:[#allocation5 + $0x78] sm:$0xff]
    %v452 = vld [vmem:[#allocation5 + $0x80] sm:$0xff]
    %v453 = vld [vmem:[#allocation5 + $0x88] sm:$0xff]
    %v454 = vld [vmem:[#allocation5 + $0x90] sm:$0xff]
    %v455 = vld [vmem:[#allocation5 + $0x98] sm:$0xff]
    %v456 = vld [vmem:[#allocation5 + $0xa0] sm:$0xff]
    %v457 = vld [vmem:[#allocation5 + $0xa8] sm:$0xff]
    %v458 = vld [vmem:[#allocation5 + $0xb0] sm:$0xff]
    %v459 = vld [vmem:[#allocation5 + $0xb8] sm:$0xff]
    %v460 = vld [vmem:[#allocation5 + $0xc0] sm:$0xff]
    %v461 = vld [vmem:[#allocation5 + $0xc8] sm:$0xff]
    %v462 = vld [vmem:[#allocation5 + $0xd0] sm:$0xff]
    %v463 = vld [vmem:[#allocation5 + $0xd8] sm:$0xff]
    %v464 = vld [vmem:[#allocation5 + $0xe0] sm:$0xff]
    %v465 = vld [vmem:[#allocation5 + $0xe8] sm:$0xff]
    %v466 = vld [vmem:[#allocation5 + $0xf0] sm:$0xff]
    %v467 = vld [vmem:[#allocation5 + $0xf8] sm:$0xff]
    %v468 = vld [vmem:[#allocation5 + $0x100] sm:$0xff]
    %v469 = vld [vmem:[#allocation5 + $0x108] sm:$0xff]
    %v470 = vld [vmem:[#allocation5 + $0x110] sm:$0xff]
    %v471 = vld [vmem:[#allocation5 + $0x118] sm:$0xff]
    %v472 = vld [vmem:[#allocation5 + $0x120] sm:$0xff]
    %v473 = vld [vmem:[#allocation5 + $0x128] sm:$0xff]
    %v474 = vld [vmem:[#allocation5 + $0x130] sm:$0xff]
    %v475 = vld [vmem:[#allocation5 + $0x138] sm:$0xff]
    %v476 = vld [vmem:[#allocation5 + $0x140] sm:$0xff]
    %v477 = vld [vmem:[#allocation5 + $0x148] sm:$0xff]
    %v478 = vld [vmem:[#allocation5 + $0x150] sm:$0xff]
    %v479 = vld [vmem:[#allocation5 + $0x158] sm:$0xff]
    %v480 = vld [vmem:[#allocation5 + $0x160] sm:$0xff]
    %v481 = vld [vmem:[#allocation5 + $0x168] sm:$0xff]
    %v482 = vld [vmem:[#allocation5 + $0x170] sm:$0xff]
    %v483 = vld [vmem:[#allocation5 + $0x178] sm:$0xff]
    %v484 = vld [vmem:[#allocation5 + $0x180] sm:$0xff]
    %v485 = vld [vmem:[#allocation5 + $0x188] sm:$0xff]
    %v486 = vld [vmem:[#allocation5 + $0x190] sm:$0xff]
    %v487 = vld [vmem:[#allocation5 + $0x198] sm:$0xff]
    %v488 = vld [vmem:[#allocation5 + $0x1a0] sm:$0xff]
    %v489 = vld [vmem:[#allocation5 + $0x1a8] sm:$0xff]
    %v490 = vld [vmem:[#allocation5 + $0x1b0] sm:$0xff]
    %v491 = vld [vmem:[#allocation5 + $0x1b8] sm:$0xff]
    %v492 = vld [vmem:[#allocation5 + $0x1c0] sm:$0xff]
    %v493 = vld [vmem:[#allocation5 + $0x1c8] sm:$0xff]
    %v494 = vld [vmem:[#allocation5 + $0x1d0] sm:$0xff]
    %v495 = vld [vmem:[#allocation5 + $0x1d8] sm:$0xff]
    %v496 = vld [vmem:[#allocation5 + $0x1e0] sm:$0xff]
    %v497 = vld [vmem:[#allocation5 + $0x1e8] sm:$0xff]
    %v498 = vld [vmem:[#allocation5 + $0x1f0] sm:$0xff]
    %v499 = vld [vmem:[#allocation5 + $0x1f8] sm:$0xff]
    %v500 = vld [vmem:[#allocation5 + $0x200] sm:$0xff]
    %v501 = vld [vmem:[#allocation5 + $0x208] sm:$0xff]
    %v502 = vld [vmem:[#allocation5 + $0x210] sm:$0xff]
    %v503 = vld [vmem:[#allocation5 + $0x218] sm:$0xff]
    %v504 = vld [vmem:[#allocation5 + $0x220] sm:$0xff]
    %v505 = vld [vmem:[#allocation5 + $0x228] sm:$0xff]
    %v506 = vld [vmem:[#allocation5 + $0x230] sm:$0xff]
    %v507 = vld [vmem:[#allocation5 + $0x238] sm:$0xff]
    %v508 = vld [vmem:[#allocation5 + $0x240] sm:$0xff]
    %v509 = vld [vmem:[#allocation5 + $0x248] sm:$0xff]
    %v510 = vld [vmem:[#allocation5 + $0x250] sm:$0xff]
    %v511 = vld [vmem:[#allocation5 + $0x258] sm:$0xff]
    %v512 = vld [vmem:[#allocation5 + $0x260] sm:$0xff]
    %v513 = vld [vmem:[#allocation5 + $0x268] sm:$0xff]
    %v514 = vld [vmem:[#allocation5 + $0x270] sm:$0xff]
    %v515 = vld [vmem:[#allocation5 + $0x278] sm:$0xff]
    %v516 = vld [vmem:[#allocation5 + $0x280] sm:$0xff]
    %v517 = vld [vmem:[#allocation5 + $0x288] sm:$0xff]
    %v518 = vld [vmem:[#allocation5 + $0x290] sm:$0xff]
    %v519 = vld [vmem:[#allocation5 + $0x298] sm:$0xff]
    %v520 = vld [vmem:[#allocation5 + $0x2a0] sm:$0xff]
    %v521 = vld [vmem:[#allocation5 + $0x2a8] sm:$0xff]
    %v522 = vld [vmem:[#allocation5 + $0x2b0] sm:$0xff]
    %v523 = vld [vmem:[#allocation5 + $0x2b8] sm:$0xff]
    %v524 = vld [vmem:[#allocation5 + $0x2c0] sm:$0xff]
    %v525 = vld [vmem:[#allocation5 + $0x2c8] sm:$0xff]
    %v526 = vld [vmem:[#allocation5 + $0x2d0] sm:$0xff]
    %v527 = vld [vmem:[#allocation5 + $0x2d8] sm:$0xff]
    %v528 = vld [vmem:[#allocation5 + $0x2e0] sm:$0xff]
    %v529 = vld [vmem:[#allocation5 + $0x2e8] sm:$0xff]
    %v530 = vld [vmem:[#allocation5 + $0x2f0] sm:$0xff]
    %v531 = vld [vmem:[#allocation5 + $0x2f8] sm:$0xff]
    %v532 = vld [vmem:[#allocation5 + $0x300] sm:$0xff]
    %v533 = vld [vmem:[#allocation5 + $0x308] sm:$0xff]
    %v534 = vld [vmem:[#allocation5 + $0x310] sm:$0xff]
    %v535 = vld [vmem:[#allocation5 + $0x318] sm:$0xff]
    %v536 = vld [vmem:[#allocation5 + $0x320] sm:$0xff]
    %v537 = vld [vmem:[#allocation5 + $0x328] sm:$0xff]
    %v538 = vld [vmem:[#allocation5 + $0x330] sm:$0xff]
    %v539 = vld [vmem:[#allocation5 + $0x338] sm:$0xff]
    %v540 = vld [vmem:[#allocation5 + $0x340] sm:$0xff]
    %v541 = vld [vmem:[#allocation5 + $0x348] sm:$0xff]
    %v542 = vld [vmem:[#allocation5 + $0x350] sm:$0xff]
    %v543 = vld [vmem:[#allocation5 + $0x358] sm:$0xff]
    %v544 = vld [vmem:[#allocation5 + $0x360] sm:$0xff]
    %v545 = vld [vmem:[#allocation5 + $0x368] sm:$0xff]
    %v546 = vld [vmem:[#allocation5 + $0x370] sm:$0xff]
    %v547 = vld [vmem:[#allocation5 + $0x378] sm:$0xff]
    %v548 = vld [vmem:[#allocation5 + $0x380] sm:$0xff]
    %v549 = vld [vmem:[#allocation5 + $0x388] sm:$0xff]
    %v550 = vld [vmem:[#allocation5 + $0x390] sm:$0xff]
    %v551 = vld [vmem:[#allocation5 + $0x398] sm:$0xff]
    %v552 = vld [vmem:[#allocation5 + $0x3a0] sm:$0xff]
    %v553 = vld [vmem:[#allocation5 + $0x3a8] sm:$0xff]
    %v554 = vld [vmem:[#allocation5 + $0x3b0] sm:$0xff]
    %v555 = vld [vmem:[#allocation5 + $0x3b8] sm:$0xff]
    %v556 = vld [vmem:[#allocation5 + $0x3c0] sm:$0xff]
    %v557 = vld [vmem:[#allocation5 + $0x3c8] sm:$0xff]
    %v558 = vld [vmem:[#allocation5 + $0x3d0] sm:$0xff]
    %v559 = vld [vmem:[#allocation5 + $0x3d8] sm:$0xff]
    %v560 = vld [vmem:[#allocation5 + $0x3e0] sm:$0xff]
    %v561 = vld [vmem:[#allocation5 + $0x3e8] sm:$0xff]
    %v562 = vld [vmem:[#allocation5 + $0x3f0] sm:$0xff]
    %v563 = vld [vmem:[#allocation5 + $0x3f8] sm:$0xff]
    %v564 = vld [vmem:[%s6] sm:$0x3]
    %v566 = vperm.slane %v564, 0
    %v567 = vperm.slane %v564, 1
    %570 = vmatpush.msra.mxu0 %v466
    %571 = vmatpush.msra.mxu0 %v464
    %572 = vmatpush.msra.mxu0 %v462
    %573 = vmatpush.msra.mxu0 %v460
    %574 = vmatpush.msra.mxu0 %v458
    %575 = vmatpush.msra.mxu0 %v456
    %576 = vmatpush.msra.mxu0 %v454
    %577 = vmatpush.msra.mxu0 %v452
    %578 = vmatpush.msra.mxu0 %v450
    %579 = vmatpush.msra.mxu0 %v448
    %580 = vmatpush.msra.mxu0 %v446
    %581 = vmatpush.msra.mxu0 %v444
    %582 = vmatpush.msra.mxu0 %v442
    %583 = vmatpush.msra.mxu0 %v440
    %584 = vmatpush.msra.mxu0 %v438
    %585 = vmatpush.msra.mxu0 %v436
    %586 = vmatmul.f32.gmra.mxu0 %v432
    %v587 = vpop.f32.mrf.mxu0
    %v588 = vadd.f32 %v566, %v587
    %589 = vdwg.mxu0
    %590 = vmatpush.msra.mxu0 %v498
    %591 = vmatpush.msra.mxu0 %v496
    %592 = vmatpush.msra.mxu0 %v494
    %593 = vmatpush.msra.mxu0 %v492
    %594 = vmatpush.msra.mxu0 %v490
    %595 = vmatpush.msra.mxu0 %v488
    %596 = vmatpush.msra.mxu0 %v486
    %597 = vmatpush.msra.mxu0 %v484
    %598 = vmatpush.msra.mxu0 %v482
    %599 = vmatpush.msra.mxu0 %v480
    %600 = vmatpush.msra.mxu0 %v478
    %601 = vmatpush.msra.mxu0 %v476
    %602 = vmatpush.msra.mxu0 %v474
    %603 = vmatpush.msra.mxu0 %v472
    %604 = vmatpush.msra.mxu0 %v470
    %605 = vmatpush.msra.mxu0 %v468
    %606 = vmatmul.f32.gmra.mxu0 %v433
    %v607 = vpop.f32.mrf.mxu0
    %v608 = vadd.f32 %v588, %v607
    %609 = vdwg.mxu0
    %610 = vmatpush.msra.mxu0 %v530
    %611 = vmatpush.msra.mxu0 %v528
    %612 = vmatpush.msra.mxu0 %v526
    %613 = vmatpush.msra.mxu0 %v524
    %614 = vmatpush.msra.mxu0 %v522
    %615 = vmatpush.msra.mxu0 %v520
    %616 = vmatpush.msra.mxu0 %v518
    %617 = vmatpush.msra.mxu0 %v516
    %618 = vmatpush.msra.mxu0 %v514
    %619 = vmatpush.msra.mxu0 %v512
    %620 = vmatpush.msra.mxu0 %v510
    %621 = vmatpush.msra.mxu0 %v508
    %622 = vmatpush.msra.mxu0 %v506
    %623 = vmatpush.msra.mxu0 %v504
    %624 = vmatpush.msra.mxu0 %v502
    %625 = vmatpush.msra.mxu0 %v500
    %626 = vmatmul.f32.gmra.mxu0 %v434
    %v627 = vpop.f32.mrf.mxu0
    %v628 = vadd.f32 %v608, %v627
    %629 = vdwg.mxu0
    %630 = vmatpush.msra.mxu0 %v562
    %631 = vmatpush.msra.mxu0 %v560
    %632 = vmatpush.msra.mxu0 %v558
    %633 = vmatpush.msra.mxu0 %v556
    %634 = vmatpush.msra.mxu0 %v554
    %635 = vmatpush.msra.mxu0 %v552
    %636 = vmatpush.msra.mxu0 %v550
    %637 = vmatpush.msra.mxu0 %v548
    %638 = vmatpush.msra.mxu0 %v546
    %639 = vmatpush.msra.mxu0 %v544
    %640 = vmatpush.msra.mxu0 %v542
    %641 = vmatpush.msra.mxu0 %v540
    %642 = vmatpush.msra.mxu0 %v538
    %643 = vmatpush.msra.mxu0 %v536
    %644 = vmatpush.msra.mxu0 %v534
    %645 = vmatpush.msra.mxu0 %v532
    %646 = vmatmul.f32.gmra.mxu0 %v435
    %v647 = vpop.f32.mrf.mxu0
    %v648 = vadd.f32 %v628, %v647
    %649 = vdwg.mxu0
    %650 = vmatpush.msra.mxu0 %v467
    %651 = vmatpush.msra.mxu0 %v465
    %652 = vmatpush.msra.mxu0 %v463
    %653 = vmatpush.msra.mxu0 %v461
    %654 = vmatpush.msra.mxu0 %v459
    %655 = vmatpush.msra.mxu0 %v457
    %656 = vmatpush.msra.mxu0 %v455
    %657 = vmatpush.msra.mxu0 %v453
    %658 = vmatpush.msra.mxu0 %v451
    %659 = vmatpush.msra.mxu0 %v449
    %660 = vmatpush.msra.mxu0 %v447
    %661 = vmatpush.msra.mxu0 %v445
    %662 = vmatpush.msra.mxu0 %v443
    %663 = vmatpush.msra.mxu0 %v441
    %664 = vmatpush.msra.mxu0 %v439
    %665 = vmatpush.msra.mxu0 %v437
    %666 = vmatmul.f32.gmra.mxu0 %v432
    %v667 = vpop.f32.mrf.mxu0
    %v668 = vadd.f32 %v567, %v667
    %669 = vdwg.mxu0
    %670 = vmatpush.msra.mxu0 %v499
    %671 = vmatpush.msra.mxu0 %v497
    %672 = vmatpush.msra.mxu0 %v495
    %673 = vmatpush.msra.mxu0 %v493
    %674 = vmatpush.msra.mxu0 %v491
    %675 = vmatpush.msra.mxu0 %v489
    %676 = vmatpush.msra.mxu0 %v487
    %677 = vmatpush.msra.mxu0 %v485
    %678 = vmatpush.msra.mxu0 %v483
    %679 = vmatpush.msra.mxu0 %v481
    %680 = vmatpush.msra.mxu0 %v479
    %681 = vmatpush.msra.mxu0 %v477
    %682 = vmatpush.msra.mxu0 %v475
    %683 = vmatpush.msra.mxu0 %v473
    %684 = vmatpush.msra.mxu0 %v471
    %685 = vmatpush.msra.mxu0 %v469
    %686 = vmatmul.f32.gmra.mxu0 %v433
    %v687 = vpop.f32.mrf.mxu0
    %v688 = vadd.f32 %v668, %v687
    %689 = vdwg.mxu0
    %690 = vmatpush.msra.mxu0 %v531
    %691 = vmatpush.msra.mxu0 %v529
    %692 = vmatpush.msra.mxu0 %v527
    %693 = vmatpush.msra.mxu0 %v525
    %694 = vmatpush.msra.mxu0 %v523
    %695 = vmatpush.msra.mxu0 %v521
    %696 = vmatpush.msra.mxu0 %v519
    %697 = vmatpush.msra.mxu0 %v517
    %698 = vmatpush.msra.mxu0 %v515
    %699 = vmatpush.msra.mxu0 %v513
    %700 = vmatpush.msra.mxu0 %v511
    %701 = vmatpush.msra.mxu0 %v509
    %702 = vmatpush.msra.mxu0 %v507
    %703 = vmatpush.msra.mxu0 %v505
    %704 = vmatpush.msra.mxu0 %v503
    %705 = vmatpush.msra.mxu0 %v501
    %706 = vmatmul.f32.gmra.mxu0 %v434
    %v707 = vpop.f32.mrf.mxu0
    %v708 = vadd.f32 %v688, %v707
    %709 = vdwg.mxu0
    %710 = vmatpush.msra.mxu0 %v563
    %711 = vmatpush.msra.mxu0 %v561
    %712 = vmatpush.msra.mxu0 %v559
    %713 = vmatpush.msra.mxu0 %v557
    %714 = vmatpush.msra.mxu0 %v555
    %715 = vmatpush.msra.mxu0 %v553
    %716 = vmatpush.msra.mxu0 %v551
    %717 = vmatpush.msra.mxu0 %v549
    %718 = vmatpush.msra.mxu0 %v547
    %719 = vmatpush.msra.mxu0 %v545
    %720 = vmatpush.msra.mxu0 %v543
    %721 = vmatpush.msra.mxu0 %v541
    %722 = vmatpush.msra.mxu0 %v539
    %723 = vmatpush.msra.mxu0 %v537
    %724 = vmatpush.msra.mxu0 %v535
    %725 = vmatpush.msra.mxu0 %v533
    %726 = vmatmul.f32.gmra.mxu0 %v435
    %v727 = vpop.f32.mrf.mxu0
    %v728 = vadd.f32 %v708, %v727
    %729 = vdwg.mxu0
    %v730 = vmax.f32 %v648, 0.0
    %v731 = vmax.f32 %v728, 0.0
    %v732 = vld [vmem:[%s7] sm:$0xff]
    %v733 = vld [vmem:[%s7 + $0x8] sm:$0xff]
    %v734 = vld [vmem:[%s7 + $0x10] sm:$0xff]
    %v735 = vld [vmem:[%s7 + $0x18] sm:$0xff]
    %v736 = vld [vmem:[%s7 + $0x20] sm:$0xff]
    %v737 = vld [vmem:[%s7 + $0x28] sm:$0xff]
    %v738 = vld [vmem:[%s7 + $0x30] sm:$0xff]
    %v739 = vld [vmem:[%s7 + $0x38] sm:$0xff]
    %v740 = vld [vmem:[%s7 + $0x40] sm:$0xff]
    %v741 = vld [vmem:[%s7 + $0x48] sm:$0xff]
    %v742 = vld [vmem:[%s7 + $0x50] sm:$0xff]
    %v743 = vld [vmem:[%s7 + $0x58] sm:$0xff]
    %v744 = vld [vmem:[%s7 + $0x60] sm:$0xff]
    %v745 = vld [vmem:[%s7 + $0x68] sm:$0xff]
    %v746 = vld [vmem:[%s7 + $0x70] sm:$0xff]
    %v747 = vld [vmem:[%s7 + $0x78] sm:$0xff]
    %v748 = vld [vmem:[%s7 + $0x80] sm:$0xff]
    %v749 = vld [vmem:[%s7 + $0x88] sm:$0xff]
    %v750 = vld [vmem:[%s7 + $0x90] sm:$0xff]
    %v751 = vld [vmem:[%s7 + $0x98] sm:$0xff]
    %v752 = vld [vmem:[%s7 + $0xa0] sm:$0xff]
    %v753 = vld [vmem:[%s7 + $0xa8] sm:$0xff]
    %v754 = vld [vmem:[%s7 + $0xb0] sm:$0xff]
    %v755 = vld [vmem:[%s7 + $0xb8] sm:$0xff]
    %v756 = vld [vmem:[%s7 + $0xc0] sm:$0xff]
    %v757 = vld [vmem:[%s7 + $0xc8] sm:$0xff]
    %v758 = vld [vmem:[%s7 + $0xd0] sm:$0xff]
    %v759 = vld [vmem:[%s7 + $0xd8] sm:$0xff]
    %v760 = vld [vmem:[%s7 + $0xe0] sm:$0xff]
    %v761 = vld [vmem:[%s7 + $0xe8] sm:$0xff]
    %v762 = vld [vmem:[%s7 + $0xf0] sm:$0xff]
    %v763 = vld [vmem:[%s7 + $0xf8] sm:$0xff]
    %v764 = vld [vmem:[%s8] sm:$0x1]
    %765 = vmatpush.msra.mxu0 %v747
    %766 = vmatpush.msra.mxu0 %v746
    %767 = vmatpush.msra.mxu0 %v745
    %768 = vmatpush.msra.mxu0 %v744
    %769 = vmatpush.msra.mxu0 %v743
    %770 = vmatpush.msra.mxu0 %v742
    %771 = vmatpush.msra.mxu0 %v741
    %772 = vmatpush.msra.mxu0 %v740
    %773 = vmatpush.msra.mxu0 %v739
    %774 = vmatpush.msra.mxu0 %v738
    %775 = vmatpush.msra.mxu0 %v737
    %776 = vmatpush.msra.mxu0 %v736
    %777 = vmatpush.msra.mxu0 %v735
    %778 = vmatpush.msra.mxu0 %v734
    %779 = vmatpush.msra.mxu0 %v733
    %780 = vmatpush.msra.mxu0 %v732
    %781 = vmatmul.f32.gmra.mxu0 %v730
    %v782 = vpop.f32.mrf.mxu0
    %v783 = vadd.f32 %v764, %v782
    %784 = vdwg.mxu0
    %785 = vmatpush.msra.mxu0 %v763
    %786 = vmatpush.msra.mxu0 %v762
    %787 = vmatpush.msra.mxu0 %v761
    %788 = vmatpush.msra.mxu0 %v760
    %789 = vmatpush.msra.mxu0 %v759
    %790 = vmatpush.msra.mxu0 %v758
    %791 = vmatpush.msra.mxu0 %v757
    %792 = vmatpush.msra.mxu0 %v756
    %793 = vmatpush.msra.mxu0 %v755
    %794 = vmatpush.msra.mxu0 %v754
    %795 = vmatpush.msra.mxu0 %v753
    %796 = vmatpush.msra.mxu0 %v752
    %797 = vmatpush.msra.mxu0 %v751
    %798 = vmatpush.msra.mxu0 %v750
    %799 = vmatpush.msra.mxu0 %v749
    %800 = vmatpush.msra.mxu0 %v748
    %801 = vmatmul.f32.gmra.mxu0 %v731
    %v802 = vpop.f32.mrf.mxu0
    %v803 = vadd.f32 %v783, %v802
    %804 = vdwg.mxu0
    %vm805 = vcmask 516096
    %v806 = vsel %vm805, %v803, -inf
    %807 = vmax.xlane.f32.xlu0 %v806
    %v808 = vpop.xlane.xlu0 %807
    %v809 = vsub.f32 %v803, %v808
    %v810 = vmul.f32 %v809, 1.442695
    %v811 = vpow.pop %v810
    %v812 = vsel %vm805, %v811, 0.0
    %813 = vadd.xlane.f32.xlu0 %v812
    %v814 = vpop.xlane.xlu0 %813
    %v815 = vrcp.pop %v814
    %v816 = vmul.f32 %v811, %v815
    %817 = vst.msk [vmem:[#allocation7] sm:$0x1] %vm805, %v816
    // Predicated region
    $region46: #{policy_forward.1} parent=1 // pred_check
      _
    $region47: #{policy_forward.1} parent=1 // pred_check_branch
      %819 = sbr.rel (0) target = $region49
    $region48: #{policy_forward.1} parent=1 // pred_region
      %821 = vsyncadd [#allocation4], 0
      %s823 = sshll.u32 [#allocation7], 4
      %s824 = int_to_ptr.vmem [resolvable:$true] %s823
      %s825 = sshll.u32 %s9, 4
      %s826 = int_to_ptr.hbm [resolvable:$true] %s825
      %828 = dma.vmem_to_hbm [thread:$0]  %s824, 16, %s826, [#allocation4]
    $region49: #{policy_forward.1} parent=1 // pred_fallthru
      _
    // Predicated region
    $region50: #{policy_forward.1} parent=1 // pred_check
      _
    $region51: #{policy_forward.1} parent=1 // pred_check_branch
      %830 = sbr.rel (0) target = $region53
    $region52: #{policy_forward.1} parent=1 // pred_region
      %832 = dma.done [#allocation4], 16
    $region53: #{policy_forward.1} parent=1 // pred_fallthru
      _
    %833 = vsyncpa [#allocation3], 1
    %834 = vsyncpa [#allocation6], 1
    %835 = vsyncpa [#allocation4], 1

</llo_original>
